<compile_context>
chip_gen: v5e
topology: v5e:2x2
jax: 0.10.0
libtpu: 0.0.40
codegen_flags: <defaults>
</compile_context>

<pallas_src>
import jax
import jax.numpy as jnp
from jax.experimental import pallas as pl
from jax.experimental.pallas import tpu as pltpu

LANE = 128
MAX_BATCH_TILE = 512  # rows per grid step when the batch axis is tiled


def _round_up(n, m):
    return ((n + m - 1) // m) * m


def my_model_forward(x, w1, b1, w2, b2):
    """x: (B, input_size); w1: (input_size, hidden); b1: (hidden,);
       w2: (hidden, output_size); b2: (output_size,).
       Weights are stored (in_features, out_features), i.e. transposed vs
       PyTorch's nn.Linear. Returns (B, output_size)."""
    B, in_size = x.shape
    hidden = w1.shape[1]
    out_size = w2.shape[1]

    h_pad = _round_up(hidden, LANE)      # 10  -> 128
    o_pad = _round_up(out_size, LANE)    # 4   -> 128
    bias_w = max(h_pad, o_pad)

    # One-time zero-padding of the tiny parameters to lane-dense widths.
    w1_p = jnp.zeros((in_size, h_pad), x.dtype).at[:, :hidden].set(w1)
    w2_p = jnp.zeros((h_pad, o_pad), x.dtype).at[:hidden, :out_size].set(w2)
    bias = jnp.zeros((2, bias_w), jnp.float32)
    bias = bias.at[0, :hidden].set(b1.astype(jnp.float32))
    bias = bias.at[1, :out_size].set(b2.astype(jnp.float32))

    # Batch tiling: single full block for small B, 512-row tiles otherwise.
    if B <= MAX_BATCH_TILE:
        tb = B
        b_pad = B
        x_p = x
    else:
        tb = MAX_BATCH_TILE
        b_pad = pl.cdiv(B, tb) * tb
        x_p = jnp.zeros((b_pad, in_size), x.dtype).at[:B].set(x)
    grid = (b_pad // tb,)

    itemsize = jnp.dtype(x.dtype).itemsize
    cost = pl.CostEstimate(
        flops=2 * b_pad * (in_size * h_pad + h_pad * o_pad),
        transcendentals=0,
        bytes_accessed=(x_p.size + w1_p.size + w2_p.size) * itemsize
        + bias.size * 4
        + b_pad * o_pad * itemsize,
    )

    def mlp_kernel(x_ref, w1_ref, w2_ref, bias_ref, o_ref):
        # fc1 on the MXU, f32 accumulation; padded hidden lanes stay 0.
        h = jnp.dot(x_ref[...], w1_ref[...], preferred_element_type=jnp.float32)
        h = jnp.maximum(h + bias_ref[0:1, :h_pad], 0.0)          # bias + ReLU (VPU)
        # fc2 on the MXU; padded hidden rows of w2 are 0, so identical result.
        out = jnp.dot(h, w2_ref[...], preferred_element_type=jnp.float32)
        o_ref[...] = (out + bias_ref[1:2, :o_pad]).astype(o_ref.dtype)

    out_padded = pl.pallas_call(
        mlp_kernel,
        out_shape=jax.ShapeDtypeStruct((b_pad, o_pad), x.dtype),
        grid=grid,
        in_specs=[
            pl.BlockSpec((tb, in_size), lambda i: (i, 0)),   # batch-tiled input
            pl.BlockSpec(w1_p.shape,    lambda i: (0, 0)),   # resident weights
            pl.BlockSpec(w2_p.shape,    lambda i: (0, 0)),
            pl.BlockSpec(bias.shape,    lambda i: (0, 0)),   # packed biases
        ],
        out_specs=pl.BlockSpec((tb, o_pad), lambda i: (i, 0)),  # lane-dense output
        compiler_params=pltpu.CompilerParams(
            dimension_semantics=("parallel",)),
        cost_estimate=cost,
    )(x_p, w1_p, w2_p, bias)

    return out_padded[:B, :out_size]


def reference_forward(x, w1, b1, w2, b2):
    h = jnp.maximum(x @ w1 + b1, 0.0)
    return h @ w2 + b2


if __name__ == "__main__":
    # Small shapes consistent with the module: Linear(input_size, 10) -> Linear(10, output_size)
    batch = 8
    input_size = 32
    hidden = 10
    output_size = 4

    key = jax.random.PRNGKey(0)
    kx, k1, k2, k3, k4 = jax.random.split(key, 5)

    x = jax.random.normal(kx, (batch, input_size), dtype=jnp.float32)

    # PyTorch-style init scale: U(-1/sqrt(fan_in), 1/sqrt(fan_in)),
    # stored as (in_features, out_features).
    lim1 = 1.0 / jnp.sqrt(jnp.float32(input_size))
    lim2 = 1.0 / jnp.sqrt(jnp.float32(hidden))
    w1 = jax.random.uniform(k1, (input_size, hidden), jnp.float32, -lim1, lim1)
    b1 = jax.random.uniform(k2, (hidden,),            jnp.float32, -lim1, lim1)
    w2 = jax.random.uniform(k3, (hidden, output_size), jnp.float32, -lim2, lim2)
    b2 = jax.random.uniform(k4, (output_size,),        jnp.float32, -lim2, lim2)

    # Small-batch (single block) path.
    out = my_model_forward(x, w1, b1, w2, b2)
    out = jax.block_until_ready(out)
    ref = reference_forward(x, w1, b1, w2, b2)
    assert out.shape == (batch, output_size)
    assert jnp.allclose(out, ref, atol=1e-5, rtol=1e-5), "mismatch vs reference (small batch)"

    # Tiled-batch path (B > 512) to exercise the grid + padding logic.
    big_b = 600
    xb = jax.random.normal(jax.random.PRNGKey(1), (big_b, input_size), dtype=jnp.float32)
    out_b = jax.block_until_ready(my_model_forward(xb, w1, b1, w2, b2))
    ref_b = reference_forward(xb, w1, b1, w2, b2)
    assert out_b.shape == (big_b, output_size)
    assert jnp.allclose(out_b, ref_b, atol=1e-5, rtol=1e-5), "mismatch vs reference (tiled batch)"

    print("KERNEL_OK")
</pallas_src>

<mosaic_0001>
module attributes {stable_mosaic.version = 11 : i64} {
  func.func @mlp_kernel(%arg0: i32, %arg1: memref<8x32xf32, #tpu.memory_space<vmem>>, %arg2: memref<32x128xf32, #tpu.memory_space<vmem>>, %arg3: memref<128x128xf32, #tpu.memory_space<vmem>>, %arg4: memref<2x128xf32, #tpu.memory_space<vmem>>, %arg5: memref<8x128xf32, #tpu.memory_space<vmem>>) attributes {dimension_semantics = [#tpu.dimension_semantics<parallel>], iteration_bounds = array<i64: 1>, scalar_prefetch = 0 : i64, scratch_operands = 0 : i64, tpu.core_type = #tpu.core_type<tc>, window_params = [{transform_indices = @transform_0, window_bounds = array<i64: 8, 32>}, {pipeline_mode = #tpu.pipeline_mode<synchronous>, transform_indices = @transform_1, window_bounds = array<i64: 32, 128>}, {pipeline_mode = #tpu.pipeline_mode<synchronous>, transform_indices = @transform_2, window_bounds = array<i64: 128, 128>}, {pipeline_mode = #tpu.pipeline_mode<synchronous>, transform_indices = @transform_3, window_bounds = array<i64: 2, 128>}, {transform_indices = @transform_4, window_bounds = array<i64: 8, 128>}]} {
    %c0 = arith.constant 0 : index
    %c0_0 = arith.constant 0 : index
    %0 = vector.load %arg1[%c0, %c0_0] : memref<8x32xf32, #tpu.memory_space<vmem>>, vector<8x32xf32>
    %c0_1 = arith.constant 0 : index
    %c0_2 = arith.constant 0 : index
    %1 = vector.load %arg2[%c0_1, %c0_2] : memref<32x128xf32, #tpu.memory_space<vmem>>, vector<32x128xf32>
    %cst = arith.constant dense<0.000000e+00> : vector<8x128xf32>
    %2 = tpu.matmul %0, %1, %cst {dimension_numbers = #tpu.dot_dimension_numbers<[1], [0], [0], [1], [0, 0, 1, 1], [], []>} : vector<8x32xf32>, vector<32x128xf32>, vector<8x128xf32> -> vector<8x128xf32>
    %c0_3 = arith.constant 0 : index
    %c0_4 = arith.constant 0 : index
    %3 = vector.load %arg4[%c0_3, %c0_4] : memref<2x128xf32, #tpu.memory_space<vmem>>, vector<1x128xf32>
    %4 = vector.broadcast %3 : vector<1x128xf32> to vector<8x128xf32>
    %5 = arith.addf %2, %4 : vector<8x128xf32>
    %cst_5 = arith.constant 0.000000e+00 : f32
    %6 = vector.broadcast %cst_5 : f32 to vector<8x128xf32>
    %7 = arith.maximumf %5, %6 : vector<8x128xf32>
    %c0_6 = arith.constant 0 : index
    %c0_7 = arith.constant 0 : index
    %8 = vector.load %arg3[%c0_6, %c0_7] : memref<128x128xf32, #tpu.memory_space<vmem>>, vector<128x128xf32>
    %cst_8 = arith.constant dense<0.000000e+00> : vector<8x128xf32>
    %9 = tpu.matmul %7, %8, %cst_8 {dimension_numbers = #tpu.dot_dimension_numbers<[1], [0], [0], [1], [0, 0, 1, 1], [], []>} : vector<8x128xf32>, vector<128x128xf32>, vector<8x128xf32> -> vector<8x128xf32>
    %c1 = arith.constant 1 : index
    %c0_9 = arith.constant 0 : index
    %10 = vector.load %arg4[%c1, %c0_9] : memref<2x128xf32, #tpu.memory_space<vmem>>, vector<1x128xf32>
    %11 = vector.broadcast %10 : vector<1x128xf32> to vector<8x128xf32>
    %12 = arith.addf %9, %11 : vector<8x128xf32>
    %c0_10 = arith.constant 0 : index
    %c0_11 = arith.constant 0 : index
    %13 = vector.load %arg5[%c0_10, %c0_11] : memref<8x128xf32, #tpu.memory_space<vmem>>, vector<8x128xf32>
    tpu.vector_store %arg5[%c0_10, %c0_11], %12 {strides = array<i32>} : memref<8x128xf32, #tpu.memory_space<vmem>>, vector<8x128xf32>,
    return
  }
  func.func @transform_0(%arg0: i32) -> (i32, i32) {
    %c0_i32 = arith.constant 0 : i32
    %c0_i32_0 = arith.constant 0 : i32
    return %arg0, %c0_i32 : i32, i32
  }
  func.func @transform_1(%arg0: i32) -> (i32, i32) {
    %c0_i32 = arith.constant 0 : i32
    %c0_i32_0 = arith.constant 0 : i32
    %c0_i32_1 = arith.constant 0 : i32
    return %c0_i32, %c0_i32_0 : i32, i32
  }
  func.func @transform_2(%arg0: i32) -> (i32, i32) {
    %c0_i32 = arith.constant 0 : i32
    %c0_i32_0 = arith.constant 0 : i32
    %c0_i32_1 = arith.constant 0 : i32
    return %c0_i32, %c0_i32_0 : i32, i32
  }
  func.func @transform_3(%arg0: i32) -> (i32, i32) {
    %c0_i32 = arith.constant 0 : i32
    %c0_i32_0 = arith.constant 0 : i32
    %c0_i32_1 = arith.constant 0 : i32
    return %c0_i32, %c0_i32_0 : i32, i32
  }
  func.func @transform_4(%arg0: i32) -> (i32, i32) {
    %c0_i32 = arith.constant 0 : i32
    %c0_i32_0 = arith.constant 0 : i32
    return %arg0, %c0_i32 : i32, i32
  }
}

</mosaic_0001>

<llo_original>
// kernel: tpu_custom_call.1
$region0: #{tpu_custom_call.1}
  #allocation0 [shape = 'u32[]', space=smem, size = 0x4, offset = 0x4, fixed_abs, tag = 'smem constant byte address 0x4 - core index']
  #allocation1 [shape = 'u32[72,128]{1,0:T(1,128)}', space=vmem, size = 0x9000, scoped, tag = 'internal scratch']
  %s0 = inlined_call_operand.hbm [shape: f32[8,32], index: 0, kind: input, shape index: {}]
  %s1 = inlined_call_operand.hbm [shape: f32[32,128], index: 1, kind: input, shape index: {}]
  %s2 = inlined_call_operand.hbm [shape: f32[128,128], index: 2, kind: input, shape index: {}]
  %s3 = inlined_call_operand.vmem [shape: f32[2,128], index: 3, kind: input, shape index: {}]
  %s4 = inlined_call_operand.hbm [shape: f32[8,128], index: 4, kind: output, shape index: {}]
  %s5 = sld [smem:[#allocation0]]
  $region38: #{tpu_custom_call.1} parent=0
    _
  %s7 = ssub.s32 1, %s5
  %s8 = scalar_select 0, %s7, %s5
  $region1: #{tpu_custom_call.1} parent=0
    #allocation2 [shape = 'u8[4096]{0}', space=vmem, size = 0x1000, scoped, tag = 'input window, operand 0, single buffered']
    #allocation3 [shape = 's32[1]{0}', space=sflag, size = 0x4, scoped, tag = 'scoped memory for tpu_custom_call.1']
    #allocation4 [shape = 's32[1]{0}', space=sflag, size = 0x4, scoped, tag = 'scoped memory for tpu_custom_call.1']
    #allocation5 [shape = 'u8[16384]{0}', space=vmem, size = 0x4000, scoped, tag = 'input window, operand 1, single buffered']
    #allocation6 [shape = 's32[1]{0}', space=sflag, size = 0x4, scoped, tag = 'scoped memory for tpu_custom_call.1']
    #allocation7 [shape = 'u8[65536]{0}', space=vmem, size = 0x10000, scoped, tag = 'input window, operand 2, single buffered']
    #allocation8 [shape = 'u8[4096]{0}', space=vmem, size = 0x1000, scoped, tag = 'output window, operand 0, single buffered']
    %9 = vsyncpa [#allocation3], 0
    %10 = vsyncpa [#allocation6], 0
    %11 = vsyncpa [#allocation4], 0
    // Predicated region
    $region2: #{tpu_custom_call.1} parent=1 // pred_check
      _
    $region3: #{tpu_custom_call.1} parent=1 // pred_check_branch
      %13 = sbr.rel (0) target = $region5
    $region4: #{tpu_custom_call.1} parent=1 // pred_region
      %15 = vsyncadd [#allocation3], 0
      %s17 = sshll.u32 %s0, 4
      %s18 = int_to_ptr.hbm [resolvable:$true] %s17
      %s19 = sshll.u32 [#allocation2], 4
      %s20 = int_to_ptr.vmem [resolvable:$true] %s19
      %22 = dma.hbm_to_vmem [thread:$0]  %s18, 128, %s20, [#allocation3]
    $region5: #{tpu_custom_call.1} parent=1 // pred_fallthru
      _
    // Predicated region
    $region6: #{tpu_custom_call.1} parent=1 // pred_check
      _
    $region7: #{tpu_custom_call.1} parent=1 // pred_check_branch
      %24 = sbr.rel (0) target = $region9
    $region8: #{tpu_custom_call.1} parent=1 // pred_region
      %26 = vsyncadd [#allocation6], 0
      %s27 = sshll.u32 %s1, 4
      %s28 = int_to_ptr.hbm [resolvable:$true] %s27
      %s29 = sshll.u32 [#allocation5], 4
      %s30 = int_to_ptr.vmem [resolvable:$true] %s29
      %35 = dma.hbm_to_vmem [thread:$0]  %s28, 512, %s30, [#allocation6], 128, 128, 8
    $region9: #{tpu_custom_call.1} parent=1 // pred_fallthru
      _
    // Predicated region
    $region10: #{tpu_custom_call.1} parent=1 // pred_check
      _
    $region11: #{tpu_custom_call.1} parent=1 // pred_check_branch
      %37 = sbr.rel (0) target = $region13
    $region12: #{tpu_custom_call.1} parent=1 // pred_region
      %39 = vsyncadd [#allocation6], 0
      %s40 = sshll.u32 %s2, 4
      %s41 = int_to_ptr.hbm [resolvable:$true] %s40
      %s42 = sshll.u32 [#allocation7], 4
      %s43 = int_to_ptr.vmem [resolvable:$true] %s42
      %48 = dma.hbm_to_vmem [thread:$0]  %s41, 2048, %s43, [#allocation6], 128, 128, 8
    $region13: #{tpu_custom_call.1} parent=1 // pred_fallthru
      _
    // Predicated region
    $region14: #{tpu_custom_call.1} parent=1 // pred_check
      _
    $region15: #{tpu_custom_call.1} parent=1 // pred_check_branch
      %50 = sbr.rel (0) target = $region17
    $region16: #{tpu_custom_call.1} parent=1 // pred_region
      _
    $region17: #{tpu_custom_call.1} parent=1 // pred_fallthru
      _
    // Predicated region
    $region18: #{tpu_custom_call.1} parent=1 // pred_check
      _
    $region19: #{tpu_custom_call.1} parent=1 // pred_check_branch
      %52 = sbr.rel (0) target = $region21
    $region20: #{tpu_custom_call.1} parent=1 // pred_region
      %54 = dma.done [#allocation3], 128
    $region21: #{tpu_custom_call.1} parent=1 // pred_fallthru
      _
    // Predicated region
    $region22: #{tpu_custom_call.1} parent=1 // pred_check
      _
    $region23: #{tpu_custom_call.1} parent=1 // pred_check_branch
      %56 = sbr.rel (0) target = $region25
    $region24: #{tpu_custom_call.1} parent=1 // pred_region
      %58 = dma.done [#allocation6], 512
    $region25: #{tpu_custom_call.1} parent=1 // pred_fallthru
      _
    // Predicated region
    $region26: #{tpu_custom_call.1} parent=1 // pred_check
      _
    $region27: #{tpu_custom_call.1} parent=1 // pred_check_branch
      %60 = sbr.rel (0) target = $region29
    $region28: #{tpu_custom_call.1} parent=1 // pred_region
      %62 = dma.done [#allocation6], 2048
    $region29: #{tpu_custom_call.1} parent=1 // pred_fallthru
      _
    %v63 = vld [vmem:[#allocation2] sm:$0xff]
    %v64 = vld [vmem:[#allocation5] sm:$0xff]
    %v65 = vld [vmem:[#allocation5 + $0x8] sm:$0xff]
    %v66 = vld [vmem:[#allocation5 + $0x10] sm:$0xff]
    %v67 = vld [vmem:[#allocation5 + $0x18] sm:$0xff]
    %v68 = vld [vmem:[%s3] sm:$0x1]
    %v69 = vperm.slane %v68, 0
    %vm70 = vcmask 261120
    %v72 = vsel %vm70, %v63, 0
    %74 = vmatpush.msra.mxu0 0.0
    %75 = vmatpush.msra.mxu0 0.0
    %76 = vmatpush.msra.mxu0 0.0
    %77 = vmatpush.msra.mxu0 0.0
    %78 = vmatpush.msra.mxu0 0.0
    %79 = vmatpush.msra.mxu0 0.0
    %80 = vmatpush.msra.mxu0 0.0
    %81 = vmatpush.msra.mxu0 0.0
    %82 = vmatpush.msra.mxu0 0.0
    %83 = vmatpush.msra.mxu0 0.0
    %84 = vmatpush.msra.mxu0 0.0
    %85 = vmatpush.msra.mxu0 0.0
    %86 = vmatpush.msra.mxu0 %v67
    %87 = vmatpush.msra.mxu0 %v66
    %88 = vmatpush.msra.mxu0 %v65
    %89 = vmatpush.msra.mxu0 %v64
    %90 = vmatmul.f32.gmra.mxu0 %v72
    %v91 = vpop.f32.mrf.mxu0
    %v92 = vadd.f32 %v69, %v91
    %93 = vdwg.mxu0
    %v94 = vmax.f32 %v92, 0.0
    %v95 = vld [vmem:[#allocation7] sm:$0xff]
    %v96 = vld [vmem:[#allocation7 + $0x8] sm:$0xff]
    %v97 = vld [vmem:[#allocation7 + $0x10] sm:$0xff]
    %v98 = vld [vmem:[#allocation7 + $0x18] sm:$0xff]
    %v99 = vld [vmem:[#allocation7 + $0x20] sm:$0xff]
    %v100 = vld [vmem:[#allocation7 + $0x28] sm:$0xff]
    %v101 = vld [vmem:[#allocation7 + $0x30] sm:$0xff]
    %v102 = vld [vmem:[#allocation7 + $0x38] sm:$0xff]
    %v103 = vld [vmem:[#allocation7 + $0x40] sm:$0xff]
    %v104 = vld [vmem:[#allocation7 + $0x48] sm:$0xff]
    %v105 = vld [vmem:[#allocation7 + $0x50] sm:$0xff]
    %v106 = vld [vmem:[#allocation7 + $0x58] sm:$0xff]
    %v107 = vld [vmem:[#allocation7 + $0x60] sm:$0xff]
    %v108 = vld [vmem:[#allocation7 + $0x68] sm:$0xff]
    %v109 = vld [vmem:[#allocation7 + $0x70] sm:$0xff]
    %v110 = vld [vmem:[#allocation7 + $0x78] sm:$0xff]
    %v111 = vld [vmem:[%s3 + $0x1] sm:$0x1]
    %v112 = vperm.slane %v111, 0
    %113 = vmatpush.msra.mxu0 %v110
    %114 = vmatpush.msra.mxu0 %v109
    %115 = vmatpush.msra.mxu0 %v108
    %116 = vmatpush.msra.mxu0 %v107
    %117 = vmatpush.msra.mxu0 %v106
    %118 = vmatpush.msra.mxu0 %v105
    %119 = vmatpush.msra.mxu0 %v104
    %120 = vmatpush.msra.mxu0 %v103
    %121 = vmatpush.msra.mxu0 %v102
    %122 = vmatpush.msra.mxu0 %v101
    %123 = vmatpush.msra.mxu0 %v100
    %124 = vmatpush.msra.mxu0 %v99
    %125 = vmatpush.msra.mxu0 %v98
    %126 = vmatpush.msra.mxu0 %v97
    %127 = vmatpush.msra.mxu0 %v96
    %128 = vmatpush.msra.mxu0 %v95
    %129 = vmatmul.f32.gmra.mxu0 %v94
    %v130 = vpop.f32.mrf.mxu0
    %v131 = vadd.f32 %v112, %v130
    %132 = vdwg.mxu0
    %133 = vst [vmem:[#allocation8] sm:$0xff] %v131
    // Predicated region
    $region30: #{tpu_custom_call.1} parent=1 // pred_check
      _
    $region31: #{tpu_custom_call.1} parent=1 // pred_check_branch
      %135 = sbr.rel (0) target = $region33
    $region32: #{tpu_custom_call.1} parent=1 // pred_region
      %137 = vsyncadd [#allocation4], 0
      %s139 = sshll.u32 [#allocation8], 4
      %s140 = int_to_ptr.vmem [resolvable:$true] %s139
      %s141 = sshll.u32 %s4, 4
      %s142 = int_to_ptr.hbm [resolvable:$true] %s141
      %144 = dma.vmem_to_hbm [thread:$0]  %s140, 128, %s142, [#allocation4]
    $region33: #{tpu_custom_call.1} parent=1 // pred_fallthru
      _
    // Predicated region
    $region34: #{tpu_custom_call.1} parent=1 // pred_check
      _
    $region35: #{tpu_custom_call.1} parent=1 // pred_check_branch
      %146 = sbr.rel (0) target = $region37
    $region36: #{tpu_custom_call.1} parent=1 // pred_region
      %148 = dma.done [#allocation4], 128
    $region37: #{tpu_custom_call.1} parent=1 // pred_fallthru
      _
    %149 = vsyncpa [#allocation3], 1
    %150 = vsyncpa [#allocation6], 1
    %151 = vsyncpa [#allocation4], 1

</llo_original>
